<compile_context>
chip_gen: v5e
topology: v5e:2x2
jax: 0.10.0
libtpu: 0.0.40
codegen_flags: <defaults>
</compile_context>

<pallas_src>
import functools

import jax
import jax.numpy as jnp
from jax.experimental import pallas as pl
from jax.experimental.pallas import tpu as pltpu


def _loss_kernel(q_ref, pt_ref, lbl_ref, thr_ref, out_ref, *, temperature, lamda):
    # Per-episode blocks (leading episode dim squeezed by the BlockSpec).
    q = q_ref[...].astype(jnp.float32)        # (N, D) query embeddings
    pt = pt_ref[...].astype(jnp.float32)      # (D, M) prototypes, transposed
    lbl = lbl_ref[...].astype(jnp.float32)    # (N, M) multilabel targets
    thr = thr_ref[...].astype(jnp.float32)    # (1, M) per-class thresholds

    t = jnp.float32(temperature)
    # Threshold exps hoisted ahead of the per-row work (EUP, off critical path).
    exp_pos_thr = jnp.exp(t * thr)            # (1, M)
    exp_neg_thr = jnp.exp(-t * thr)           # (1, M)

    # --- squared euclidean distance up to a per-row constant ----------------
    #   dists = ||q||^2 + ||p||^2 - 2 q.p ;  ||q||^2 cancels in the row softmax
    # Both matmuls contract lhs dim 1 with rhs dim 0 (layout-natural MXU ops).
    ones_row = jnp.ones((1, q.shape[1]), jnp.float32)
    pp = jax.lax.dot_general(ones_row, pt * pt, (((1,), (0,)), ((), ())),
                             preferred_element_type=jnp.float32)      # (1, M)
    qp = jax.lax.dot_general(q, pt, (((1,), (0,)), ((), ())),
                             preferred_element_type=jnp.float32)      # (N, M)
    neg = 2.0 * qp - pp              # == -(dists - ||q||^2), per-row shift only

    # --- single softmax pass; p_y and log_p_y share the shifted exps --------
    # (softmax(-dists + 1e-5) == softmax(-dists): constant row shift)
    m = jnp.max(neg, axis=1, keepdims=True)
    s = neg - m
    es = jnp.exp(s)
    denom = jnp.sum(es, axis=1, keepdims=True)                        # (N, 1)
    log_p_y = s - jnp.log(denom)
    p_y = es / denom            # exact divide: p_y feeds the threshold compare

    # main loss: mean(-labels * log_p_y)
    main_loss = jnp.mean(-lbl * log_p_y)

    # --- Circle_Loss(p_y, labels, thresholds) -------------------------------
    positive = lbl * p_y
    negative = (1.0 - lbl) * p_y
    sum_neg = jnp.sum(jnp.exp(t * negative), axis=0, keepdims=True)   # (1, M)
    sum_pos = jnp.sum(jnp.exp(-t * positive), axis=0, keepdims=True)  # (1, M)
    circle = jnp.mean(jnp.log(exp_pos_thr + sum_neg + 1e-10)
                      + jnp.log(exp_neg_thr + sum_pos + 1e-10))

    total = main_loss + jnp.float32(lamda) * circle

    # --- metrics (micro P/R/F1, exact-match acc, count acc), in-kernel ------
    y_pred = (p_y - thr >= 0.0).astype(jnp.float32)                   # (N, M)
    count_pred = jnp.sum(y_pred, axis=1, keepdims=True)               # (N, 1)
    query_counts = jnp.sum(lbl, axis=1, keepdims=True)                # (N, 1)

    tp = jnp.sum(y_pred * lbl)
    fp = jnp.sum(count_pred) - tp         # derived from existing row sums
    fn = jnp.sum(query_counts) - tp

    d_p = tp + fp
    d_r = tp + fn
    prec = jnp.where(d_p > 0.0, tp / jnp.maximum(d_p, 1.0), 0.0)
    rec = jnp.where(d_r > 0.0, tp / jnp.maximum(d_r, 1.0), 0.0)
    d_f = prec + rec
    f1 = jnp.where(d_f > 0.0, 2.0 * prec * rec / jnp.maximum(d_f, 1e-30), 0.0)

    # exact-match (multilabel accuracy_score)
    mismatch = jnp.sum(jnp.abs(y_pred - lbl), axis=1, keepdims=True)  # (N, 1)
    acc = jnp.mean((mismatch < 0.5).astype(jnp.float32))

    # count accuracy (counts are exact small-integer-valued floats)
    c_acc = jnp.mean(
        (jnp.abs(count_pred - query_counts) < 0.5).astype(jnp.float32))

    # --- pack the 6 scalars into one lane-dense (1, 128) row ----------------
    lane = jax.lax.broadcasted_iota(jnp.int32, (1, 128), 1)
    out = jnp.zeros((1, 128), jnp.float32)
    out = jnp.where(lane == 0, total, out)
    out = jnp.where(lane == 1, prec, out)
    out = jnp.where(lane == 2, rec, out)
    out = jnp.where(lane == 3, f1, out)
    out = jnp.where(lane == 4, acc, out)
    out = jnp.where(lane == 5, c_acc, out)
    out_ref[...] = out


def loss_fn_forward_batched(prototypes, query_emb, thresholds, query_labels,
                            *, temperature=0.03, lamda=0.5):
    """Batched forward pass of Loss_fn over a leading episode axis.

    Shapes: prototypes (E, M, D), query_emb (E, N, D), thresholds (E, M, 1)
    or (E, M), query_labels (E, N, M).  Returns six (E,) f32 vectors
    (loss, p, r, f, acc, c_acc).
    """
    E, N, D = query_emb.shape
    M = prototypes.shape[1]

    pt = jnp.swapaxes(prototypes, -1, -2)          # (E, D, M): layout-natural
    thr = thresholds.reshape(E, 1, M)              # thresholds.view(-1) per ep
    lbl = query_labels

    kernel = functools.partial(_loss_kernel,
                               temperature=float(temperature),
                               lamda=float(lamda))

    out = pl.pallas_call(
        kernel,
        out_shape=jax.ShapeDtypeStruct((E, 1, 128), jnp.float32),
        grid=(E,),
        in_specs=[
            pl.BlockSpec((None, N, D), lambda e: (e, 0, 0)),   # query_emb
            pl.BlockSpec((None, D, M), lambda e: (e, 0, 0)),   # prototypes^T
            pl.BlockSpec((None, N, M), lambda e: (e, 0, 0)),   # labels
            pl.BlockSpec((None, 1, M), lambda e: (e, 0, 0)),   # thresholds
        ],
        out_specs=pl.BlockSpec((None, 1, 128), lambda e: (e, 0, 0)),
        compiler_params=pltpu.CompilerParams(
            dimension_semantics=("parallel",)),
    )(query_emb, pt, lbl, thr)

    out = out[:, 0, :]                                         # (E, 128)
    return (out[:, 0], out[:, 1], out[:, 2], out[:, 3], out[:, 4], out[:, 5])


def loss_fn_forward(prototypes, query_emb, thresholds, query_labels,
                    *, temperature=0.03, lamda=0.5):
    """Single-episode forward pass of Loss_fn: (loss, p, r, f, acc, c_acc)."""
    M = prototypes.shape[0]
    outs = loss_fn_forward_batched(
        prototypes[None], query_emb[None], thresholds.reshape(1, M, 1),
        query_labels[None], temperature=temperature, lamda=lamda)
    return tuple(o[0] for o in outs)


def _reference(prototypes, query_emb, thresholds, query_labels,
               temperature, lamda):
    """Pure-JAX reference mirroring the PyTorch forward (single episode)."""
    q = query_emb.astype(jnp.float32)
    p = prototypes.astype(jnp.float32)
    lbl = query_labels.astype(jnp.float32)
    thr = thresholds.reshape(-1).astype(jnp.float32)
    dists = jnp.sum((q[:, None, :] - p[None, :, :]) ** 2, axis=2)
    p_y = jax.nn.softmax(-dists + 1e-5, axis=1)
    log_p_y = jax.nn.log_softmax(-dists, axis=1)
    loss = jnp.mean(-lbl * log_p_y)
    pos = lbl * p_y
    neg = (1.0 - lbl) * p_y
    cl = (jnp.log(jnp.exp(temperature * thr)
                  + jnp.sum(jnp.exp(temperature * neg), axis=0) + 1e-10)
          + jnp.log(jnp.exp(-temperature * thr)
                    + jnp.sum(jnp.exp(-temperature * pos), axis=0) + 1e-10))
    loss = loss + lamda * jnp.mean(cl)
    y_pred = (p_y - thr >= 0.0).astype(jnp.float32)
    tp = jnp.sum(y_pred * lbl)
    fp = jnp.sum(y_pred * (1.0 - lbl))
    fn = jnp.sum((1.0 - y_pred) * lbl)
    prec = jnp.where(tp + fp > 0, tp / jnp.maximum(tp + fp, 1.0), 0.0)
    rec = jnp.where(tp + fn > 0, tp / jnp.maximum(tp + fn, 1.0), 0.0)
    f1 = jnp.where(prec + rec > 0,
                   2.0 * prec * rec / jnp.maximum(prec + rec, 1e-30), 0.0)
    acc = jnp.mean(jnp.all(y_pred == lbl, axis=1).astype(jnp.float32))
    c_acc = jnp.mean(
        (jnp.sum(y_pred, axis=1) == jnp.sum(lbl, axis=1)).astype(jnp.float32))
    return loss, prec, rec, f1, acc, c_acc


if __name__ == "__main__":
    key = jax.random.PRNGKey(0)
    k1, k2, k3, k4 = jax.random.split(key, 4)

    # Few-shot sizes: N=8 query examples, M=4 classes/prototypes, D=32 emb dim.
    N, M, D = 8, 4, 32
    prototypes = jax.random.normal(k1, (M, D), dtype=jnp.float32)
    query_emb = jax.random.normal(k2, (N, D), dtype=jnp.float32)
    # thresholds come out of the model as (M, 1); the forward does .view(-1)
    thresholds = jax.random.uniform(k3, (M, 1), minval=0.1, maxval=0.4,
                                    dtype=jnp.float32)
    query_labels = (jax.random.uniform(k4, (N, M)) > 0.5).astype(jnp.float32)

    # Single episode (matches Loss_fn.forward); args.lamda=0.5, temperature=0.03.
    outs = loss_fn_forward(prototypes, query_emb, thresholds, query_labels,
                           temperature=0.03, lamda=0.5)
    outs = jax.block_until_ready(outs)

    ref = _reference(prototypes, query_emb, thresholds, query_labels,
                     0.03, 0.5)
    for got, want in zip(outs, ref):
        assert bool(jnp.isfinite(got))
        assert abs(float(got) - float(want)) < 1e-3, (float(got), float(want))

    # Batched episodes (E=4): one gridded call, "parallel" episode axis.
    E = 4
    kb = jax.random.split(jax.random.PRNGKey(1), 4)
    protos_b = jax.random.normal(kb[0], (E, M, D), dtype=jnp.float32)
    q_b = jax.random.normal(kb[1], (E, N, D), dtype=jnp.float32)
    thr_b = jax.random.uniform(kb[2], (E, M, 1), minval=0.1, maxval=0.4,
                               dtype=jnp.float32)
    lbl_b = (jax.random.uniform(kb[3], (E, N, M)) > 0.5).astype(jnp.float32)
    outs_b = loss_fn_forward_batched(protos_b, q_b, thr_b, lbl_b,
                                     temperature=0.03, lamda=0.5)
    outs_b = jax.block_until_ready(outs_b)
    for v in outs_b:
        assert bool(jnp.all(jnp.isfinite(v)))

    print("KERNEL_OK")
</pallas_src>

<mosaic_0001>
module attributes {stable_mosaic.version = 11 : i64} {
  func.func @_loss_kernel(%arg0: i32, %arg1: memref<1x8x32xf32, #tpu.memory_space<vmem>>, %arg2: memref<1x32x4xf32, #tpu.memory_space<vmem>>, %arg3: memref<1x8x4xf32, #tpu.memory_space<vmem>>, %arg4: memref<1x1x4xf32, #tpu.memory_space<vmem>>, %arg5: memref<1x1x128xf32, #tpu.memory_space<vmem>>) attributes {dimension_semantics = [#tpu.dimension_semantics<parallel>], iteration_bounds = array<i64: 1>, scalar_prefetch = 0 : i64, scratch_operands = 0 : i64, tpu.core_type = #tpu.core_type<tc>, window_params = [{transform_indices = @transform_0, window_bounds = array<i64: 1, 8, 32>}, {transform_indices = @transform_1, window_bounds = array<i64: 1, 32, 4>}, {transform_indices = @transform_2, window_bounds = array<i64: 1, 8, 4>}, {transform_indices = @transform_3, window_bounds = array<i64: 1, 1, 4>}, {transform_indices = @transform_4, window_bounds = array<i64: 1, 1, 128>}]} {
    %c0 = arith.constant 0 : index
    %c0_0 = arith.constant 0 : index
    %c0_1 = arith.constant 0 : index
    %0 = vector.load %arg1[%c0, %c0_0, %c0_1] : memref<1x8x32xf32, #tpu.memory_space<vmem>>, vector<1x8x32xf32>
    %1 = vector.shape_cast %0 : vector<1x8x32xf32> to vector<8x32xf32>
    %c0_2 = arith.constant 0 : index
    %c0_3 = arith.constant 0 : index
    %c0_4 = arith.constant 0 : index
    %2 = vector.load %arg2[%c0_2, %c0_3, %c0_4] : memref<1x32x4xf32, #tpu.memory_space<vmem>>, vector<1x32x4xf32>
    %3 = vector.shape_cast %2 : vector<1x32x4xf32> to vector<32x4xf32>
    %c0_5 = arith.constant 0 : index
    %c0_6 = arith.constant 0 : index
    %c0_7 = arith.constant 0 : index
    %4 = vector.load %arg3[%c0_5, %c0_6, %c0_7] : memref<1x8x4xf32, #tpu.memory_space<vmem>>, vector<1x8x4xf32>
    %5 = vector.shape_cast %4 : vector<1x8x4xf32> to vector<8x4xf32>
    %c0_8 = arith.constant 0 : index
    %c0_9 = arith.constant 0 : index
    %c0_10 = arith.constant 0 : index
    %6 = vector.load %arg4[%c0_8, %c0_9, %c0_10] : memref<1x1x4xf32, #tpu.memory_space<vmem>>, vector<1x1x4xf32>
    %7 = vector.shape_cast %6 : vector<1x1x4xf32> to vector<1x4xf32>
    %cst = arith.constant 3.000000e-02 : f32
    %8 = vector.broadcast %cst : f32 to vector<1x4xf32>
    %9 = arith.mulf %8, %7 : vector<1x4xf32>
    %10 = math.exp %9 : vector<1x4xf32>
    %cst_11 = arith.constant 0.000000e+00 : f32
    %cst_12 = arith.constant 3.000000e-02 : f32
    %11 = arith.subf %cst_11, %cst_12 : f32
    %12 = vector.broadcast %11 : f32 to vector<1x4xf32>
    %13 = arith.mulf %12, %7 : vector<1x4xf32>
    %14 = math.exp %13 : vector<1x4xf32>
    %cst_13 = arith.constant 1.000000e+00 : f32
    %15 = vector.broadcast %cst_13 : f32 to vector<1x32xf32>
    %16 = arith.mulf %3, %3 : vector<32x4xf32>
    %cst_14 = arith.constant dense<0.000000e+00> : vector<1x4xf32>
    %17 = tpu.matmul %15, %16, %cst_14 {dimension_numbers = #tpu.dot_dimension_numbers<[1], [0], [0], [1], [0, 0, 1, 1], [], []>} : vector<1x32xf32>, vector<32x4xf32>, vector<1x4xf32> -> vector<1x4xf32>
    %cst_15 = arith.constant dense<0.000000e+00> : vector<8x4xf32>
    %18 = tpu.matmul %1, %3, %cst_15 {dimension_numbers = #tpu.dot_dimension_numbers<[1], [0], [0], [1], [0, 0, 1, 1], [], []>} : vector<8x32xf32>, vector<32x4xf32>, vector<8x4xf32> -> vector<8x4xf32>
    %cst_16 = arith.constant 2.000000e+00 : f32
    %19 = vector.broadcast %cst_16 : f32 to vector<8x4xf32>
    %20 = arith.mulf %19, %18 : vector<8x4xf32>
    %21 = vector.broadcast %17 : vector<1x4xf32> to vector<8x4xf32>
    %22 = arith.subf %20, %21 : vector<8x4xf32>
    %cst_17 = arith.constant dense<0xFF800000> : vector<8xf32>
    %23 = vector.multi_reduction <maximumf>, %22, %cst_17 [1] : vector<8x4xf32> to vector<8xf32>
    %24 = vector.shape_cast %23 : vector<8xf32> to vector<8x1xf32>
    %25 = vector.broadcast %24 : vector<8x1xf32> to vector<8x4xf32>
    %26 = arith.subf %22, %25 : vector<8x4xf32>
    %27 = math.exp %26 : vector<8x4xf32>
    %cst_18 = arith.constant dense<0.000000e+00> : vector<8xf32>
    %28 = vector.multi_reduction <add>, %27, %cst_18 [1] : vector<8x4xf32> to vector<8xf32>
    %29 = vector.shape_cast %28 : vector<8xf32> to vector<8x1xf32>
    %30 = math.log %29 : vector<8x1xf32>
    %31 = vector.broadcast %30 : vector<8x1xf32> to vector<8x4xf32>
    %32 = arith.subf %26, %31 : vector<8x4xf32>
    %33 = vector.broadcast %29 : vector<8x1xf32> to vector<8x4xf32>
    %34 = arith.divf %27, %33 : vector<8x4xf32>
    %cst_19 = arith.constant 0.000000e+00 : f32
    %35 = vector.broadcast %cst_19 : f32 to vector<8x4xf32>
    %36 = arith.subf %35, %5 : vector<8x4xf32>
    %37 = arith.mulf %36, %32 : vector<8x4xf32>
    %38 = vector.shape_cast %37 : vector<8x4xf32> to vector<1x8x4xf32>
    %cst_20 = arith.constant dense<0.000000e+00> : vector<1xf32>
    %39 = vector.multi_reduction <add>, %38, %cst_20 [1, 2] : vector<1x8x4xf32> to vector<1xf32>
    %40 = vector.shape_cast %39 : vector<1xf32> to vector<1x1x1xf32>
    %41 = vector.extract %40[0, 0, 0] : f32 from vector<1x1x1xf32>
    %cst_21 = arith.constant 3.200000e+01 : f32
    %42 = arith.divf %41, %cst_21 : f32
    %43 = arith.mulf %5, %34 : vector<8x4xf32>
    %cst_22 = arith.constant 1.000000e+00 : f32
    %44 = vector.broadcast %cst_22 : f32 to vector<8x4xf32>
    %45 = arith.subf %44, %5 : vector<8x4xf32>
    %46 = arith.mulf %45, %34 : vector<8x4xf32>
    %cst_23 = arith.constant 3.000000e-02 : f32
    %47 = vector.broadcast %cst_23 : f32 to vector<8x4xf32>
    %48 = arith.mulf %47, %46 : vector<8x4xf32>
    %49 = math.exp %48 : vector<8x4xf32>
    %cst_24 = arith.constant dense<0.000000e+00> : vector<4xf32>
    %50 = vector.multi_reduction <add>, %49, %cst_24 [0] : vector<8x4xf32> to vector<4xf32>
    %51 = vector.shape_cast %50 : vector<4xf32> to vector<1x4xf32>
    %cst_25 = arith.constant 0.000000e+00 : f32
    %cst_26 = arith.constant 3.000000e-02 : f32
    %52 = arith.subf %cst_25, %cst_26 : f32
    %53 = vector.broadcast %52 : f32 to vector<8x4xf32>
    %54 = arith.mulf %53, %43 : vector<8x4xf32>
    %55 = math.exp %54 : vector<8x4xf32>
    %cst_27 = arith.constant dense<0.000000e+00> : vector<4xf32>
    %56 = vector.multi_reduction <add>, %55, %cst_27 [0] : vector<8x4xf32> to vector<4xf32>
    %57 = vector.shape_cast %56 : vector<4xf32> to vector<1x4xf32>
    %58 = arith.addf %10, %51 : vector<1x4xf32>
    %cst_28 = arith.constant 1.000000e-10 : f32
    %59 = vector.broadcast %cst_28 : f32 to vector<1x4xf32>
    %60 = arith.addf %58, %59 : vector<1x4xf32>
    %61 = math.log %60 : vector<1x4xf32>
    %62 = arith.addf %14, %57 : vector<1x4xf32>
    %cst_29 = arith.constant 1.000000e-10 : f32
    %63 = vector.broadcast %cst_29 : f32 to vector<1x4xf32>
    %64 = arith.addf %62, %63 : vector<1x4xf32>
    %65 = math.log %64 : vector<1x4xf32>
    %66 = arith.addf %61, %65 : vector<1x4xf32>
    %67 = vector.shape_cast %66 : vector<1x4xf32> to vector<1x1x4xf32>
    %cst_30 = arith.constant dense<0.000000e+00> : vector<1xf32>
    %68 = vector.multi_reduction <add>, %67, %cst_30 [1, 2] : vector<1x1x4xf32> to vector<1xf32>
    %69 = vector.shape_cast %68 : vector<1xf32> to vector<1x1x1xf32>
    %70 = vector.extract %69[0, 0, 0] : f32 from vector<1x1x1xf32>
    %cst_31 = arith.constant 4.000000e+00 : f32
    %71 = arith.divf %70, %cst_31 : f32
    %cst_32 = arith.constant 5.000000e-01 : f32
    %72 = arith.mulf %cst_32, %71 : f32
    %73 = arith.addf %42, %72 : f32
    %74 = vector.broadcast %7 : vector<1x4xf32> to vector<8x4xf32>
    %75 = arith.subf %34, %74 : vector<8x4xf32>
    %cst_33 = arith.constant 0.000000e+00 : f32
    %76 = vector.broadcast %cst_33 : f32 to vector<8x4xf32>
    %77 = arith.cmpf oge, %75, %76 : vector<8x4xf32>
    %78 = arith.extui %77 : vector<8x4xi1> to vector<8x4xi32>
    %79 = arith.sitofp %78 : vector<8x4xi32> to vector<8x4xf32>
    %cst_34 = arith.constant dense<0.000000e+00> : vector<8xf32>
    %80 = vector.multi_reduction <add>, %79, %cst_34 [1] : vector<8x4xf32> to vector<8xf32>
    %81 = vector.shape_cast %80 : vector<8xf32> to vector<8x1xf32>
    %cst_35 = arith.constant dense<0.000000e+00> : vector<8xf32>
    %82 = vector.multi_reduction <add>, %5, %cst_35 [1] : vector<8x4xf32> to vector<8xf32>
    %83 = vector.shape_cast %82 : vector<8xf32> to vector<8x1xf32>
    %84 = arith.mulf %79, %5 : vector<8x4xf32>
    %85 = vector.shape_cast %84 : vector<8x4xf32> to vector<1x8x4xf32>
    %cst_36 = arith.constant dense<0.000000e+00> : vector<1xf32>
    %86 = vector.multi_reduction <add>, %85, %cst_36 [1, 2] : vector<1x8x4xf32> to vector<1xf32>
    %87 = vector.shape_cast %86 : vector<1xf32> to vector<1x1x1xf32>
    %88 = vector.extract %87[0, 0, 0] : f32 from vector<1x1x1xf32>
    %89 = vector.shape_cast %81 : vector<8x1xf32> to vector<1x8x1xf32>
    %cst_37 = arith.constant dense<0.000000e+00> : vector<1xf32>
    %90 = vector.multi_reduction <add>, %89, %cst_37 [1, 2] : vector<1x8x1xf32> to vector<1xf32>
    %91 = vector.shape_cast %90 : vector<1xf32> to vector<1x1x1xf32>
    %92 = vector.extract %91[0, 0, 0] : f32 from vector<1x1x1xf32>
    %93 = arith.subf %92, %88 : f32
    %94 = vector.shape_cast %83 : vector<8x1xf32> to vector<1x8x1xf32>
    %cst_38 = arith.constant dense<0.000000e+00> : vector<1xf32>
    %95 = vector.multi_reduction <add>, %94, %cst_38 [1, 2] : vector<1x8x1xf32> to vector<1xf32>
    %96 = vector.shape_cast %95 : vector<1xf32> to vector<1x1x1xf32>
    %97 = vector.extract %96[0, 0, 0] : f32 from vector<1x1x1xf32>
    %98 = arith.subf %97, %88 : f32
    %99 = arith.addf %88, %93 : f32
    %100 = arith.addf %88, %98 : f32
    %cst_39 = arith.constant 0.000000e+00 : f32
    %101 = arith.cmpf ogt, %99, %cst_39 : f32
    %cst_40 = arith.constant 1.000000e+00 : f32
    %102 = arith.maximumf %99, %cst_40 : f32
    %103 = arith.divf %88, %102 : f32
    %cst_41 = arith.constant 0.000000e+00 : f32
    %104 = arith.select %101, %103, %cst_41 : f32
    %cst_42 = arith.constant 0.000000e+00 : f32
    %105 = arith.cmpf ogt, %100, %cst_42 : f32
    %cst_43 = arith.constant 1.000000e+00 : f32
    %106 = arith.maximumf %100, %cst_43 : f32
    %107 = arith.divf %88, %106 : f32
    %cst_44 = arith.constant 0.000000e+00 : f32
    %108 = arith.select %105, %107, %cst_44 : f32
    %109 = arith.addf %104, %108 : f32
    %cst_45 = arith.constant 0.000000e+00 : f32
    %110 = arith.cmpf ogt, %109, %cst_45 : f32
    %cst_46 = arith.constant 2.000000e+00 : f32
    %111 = arith.mulf %cst_46, %104 : f32
    %112 = arith.mulf %111, %108 : f32
    %cst_47 = arith.constant 1.000000e-30 : f32
    %113 = arith.maximumf %109, %cst_47 : f32
    %114 = arith.divf %112, %113 : f32
    %cst_48 = arith.constant 0.000000e+00 : f32
    %115 = arith.select %110, %114, %cst_48 : f32
    %116 = arith.subf %79, %5 : vector<8x4xf32>
    %117 = math.absf %116 : vector<8x4xf32>
    %cst_49 = arith.constant dense<0.000000e+00> : vector<8xf32>
    %118 = vector.multi_reduction <add>, %117, %cst_49 [1] : vector<8x4xf32> to vector<8xf32>
    %119 = vector.shape_cast %118 : vector<8xf32> to vector<8x1xf32>
    %cst_50 = arith.constant 5.000000e-01 : f32
    %120 = vector.broadcast %cst_50 : f32 to vector<8x1xf32>
    %121 = arith.cmpf olt, %119, %120 : vector<8x1xf32>
    %122 = arith.extui %121 : vector<8x1xi1> to vector<8x1xi32>
    %123 = arith.sitofp %122 : vector<8x1xi32> to vector<8x1xf32>
    %124 = vector.shape_cast %123 : vector<8x1xf32> to vector<1x8x1xf32>
    %cst_51 = arith.constant dense<0.000000e+00> : vector<1xf32>
    %125 = vector.multi_reduction <add>, %124, %cst_51 [1, 2] : vector<1x8x1xf32> to vector<1xf32>
    %126 = vector.shape_cast %125 : vector<1xf32> to vector<1x1x1xf32>
    %127 = vector.extract %126[0, 0, 0] : f32 from vector<1x1x1xf32>
    %cst_52 = arith.constant 8.000000e+00 : f32
    %128 = arith.divf %127, %cst_52 : f32
    %129 = arith.subf %81, %83 : vector<8x1xf32>
    %130 = math.absf %129 : vector<8x1xf32>
    %cst_53 = arith.constant 5.000000e-01 : f32
    %131 = vector.broadcast %cst_53 : f32 to vector<8x1xf32>
    %132 = arith.cmpf olt, %130, %131 : vector<8x1xf32>
    %133 = arith.extui %132 : vector<8x1xi1> to vector<8x1xi32>
    %134 = arith.sitofp %133 : vector<8x1xi32> to vector<8x1xf32>
    %135 = vector.shape_cast %134 : vector<8x1xf32> to vector<1x8x1xf32>
    %cst_54 = arith.constant dense<0.000000e+00> : vector<1xf32>
    %136 = vector.multi_reduction <add>, %135, %cst_54 [1, 2] : vector<1x8x1xf32> to vector<1xf32>
    %137 = vector.shape_cast %136 : vector<1xf32> to vector<1x1x1xf32>
    %138 = vector.extract %137[0, 0, 0] : f32 from vector<1x1x1xf32>
    %cst_55 = arith.constant 8.000000e+00 : f32
    %139 = arith.divf %138, %cst_55 : f32
    %140 = tpu.iota {dimensions = array<i32: 1>} : vector<1x128xi32>
    %cst_56 = arith.constant 0.000000e+00 : f32
    %141 = vector.broadcast %cst_56 : f32 to vector<1x128xf32>
    %c0_i32 = arith.constant 0 : i32
    %142 = vector.broadcast %c0_i32 : i32 to vector<1x128xi32>
    %143 = arith.cmpi eq, %140, %142 : vector<1x128xi32>
    %144 = vector.broadcast %73 : f32 to vector<1x128xf32>
    %145 = arith.select %143, %144, %141 : vector<1x128xi1>, vector<1x128xf32>
    %c1_i32 = arith.constant 1 : i32
    %146 = vector.broadcast %c1_i32 : i32 to vector<1x128xi32>
    %147 = arith.cmpi eq, %140, %146 : vector<1x128xi32>
    %148 = vector.broadcast %104 : f32 to vector<1x128xf32>
    %149 = arith.select %147, %148, %145 : vector<1x128xi1>, vector<1x128xf32>
    %c2_i32 = arith.constant 2 : i32
    %150 = vector.broadcast %c2_i32 : i32 to vector<1x128xi32>
    %151 = arith.cmpi eq, %140, %150 : vector<1x128xi32>
    %152 = vector.broadcast %108 : f32 to vector<1x128xf32>
    %153 = arith.select %151, %152, %149 : vector<1x128xi1>, vector<1x128xf32>
    %c3_i32 = arith.constant 3 : i32
    %154 = vector.broadcast %c3_i32 : i32 to vector<1x128xi32>
    %155 = arith.cmpi eq, %140, %154 : vector<1x128xi32>
    %156 = vector.broadcast %115 : f32 to vector<1x128xf32>
    %157 = arith.select %155, %156, %153 : vector<1x128xi1>, vector<1x128xf32>
    %c4_i32 = arith.constant 4 : i32
    %158 = vector.broadcast %c4_i32 : i32 to vector<1x128xi32>
    %159 = arith.cmpi eq, %140, %158 : vector<1x128xi32>
    %160 = vector.broadcast %128 : f32 to vector<1x128xf32>
    %161 = arith.select %159, %160, %157 : vector<1x128xi1>, vector<1x128xf32>
    %c5_i32 = arith.constant 5 : i32
    %162 = vector.broadcast %c5_i32 : i32 to vector<1x128xi32>
    %163 = arith.cmpi eq, %140, %162 : vector<1x128xi32>
    %164 = vector.broadcast %139 : f32 to vector<1x128xf32>
    %165 = arith.select %163, %164, %161 : vector<1x128xi1>, vector<1x128xf32>
    %c0_57 = arith.constant 0 : index
    %c0_58 = arith.constant 0 : index
    %c0_59 = arith.constant 0 : index
    %166 = vector.load %arg5[%c0_57, %c0_58, %c0_59] : memref<1x1x128xf32, #tpu.memory_space<vmem>>, vector<1x1x128xf32>
    %167 = vector.shape_cast %166 : vector<1x1x128xf32> to vector<1x128xf32>
    %168 = vector.shape_cast %165 : vector<1x128xf32> to vector<1x1x128xf32>
    tpu.vector_store %arg5[%c0_57, %c0_58, %c0_59], %168 {strides = array<i32>} : memref<1x1x128xf32, #tpu.memory_space<vmem>>, vector<1x1x128xf32>,
    return
  }
  func.func @transform_0(%arg0: i32) -> (i32, i32, i32) {
    %c0_i32 = arith.constant 0 : i32
    %c0_i32_0 = arith.constant 0 : i32
    %c0_i32_1 = arith.constant 0 : i32
    return %arg0, %c0_i32, %c0_i32_0 : i32, i32, i32
  }
  func.func @transform_1(%arg0: i32) -> (i32, i32, i32) {
    %c0_i32 = arith.constant 0 : i32
    %c0_i32_0 = arith.constant 0 : i32
    %c0_i32_1 = arith.constant 0 : i32
    return %arg0, %c0_i32, %c0_i32_0 : i32, i32, i32
  }
  func.func @transform_2(%arg0: i32) -> (i32, i32, i32) {
    %c0_i32 = arith.constant 0 : i32
    %c0_i32_0 = arith.constant 0 : i32
    %c0_i32_1 = arith.constant 0 : i32
    return %arg0, %c0_i32, %c0_i32_0 : i32, i32, i32
  }
  func.func @transform_3(%arg0: i32) -> (i32, i32, i32) {
    %c0_i32 = arith.constant 0 : i32
    %c0_i32_0 = arith.constant 0 : i32
    %c0_i32_1 = arith.constant 0 : i32
    return %arg0, %c0_i32, %c0_i32_0 : i32, i32, i32
  }
  func.func @transform_4(%arg0: i32) -> (i32, i32, i32) {
    %c0_i32 = arith.constant 0 : i32
    %c0_i32_0 = arith.constant 0 : i32
    %c0_i32_1 = arith.constant 0 : i32
    return %arg0, %c0_i32, %c0_i32_0 : i32, i32, i32
  }
}

</mosaic_0001>

<llo_original>
// kernel: tpu_custom_call.1
$region0: #{tpu_custom_call.1}
  #allocation0 [shape = 'u32[]', space=smem, size = 0x4, offset = 0x4, fixed_abs, tag = 'smem constant byte address 0x4 - core index']
  #allocation1 [shape = 'u32[72,128]{1,0:T(1,128)}', space=vmem, size = 0x9000, scoped, tag = 'internal scratch']
  %s0 = inlined_call_operand.vmem [shape: f32[1,8,32], index: 0, kind: input, shape index: {}]
  %s1 = inlined_call_operand.vmem [shape: f32[1,32,4], index: 1, kind: input, shape index: {}]
  %s2 = inlined_call_operand.vmem [shape: f32[1,8,4], index: 2, kind: input, shape index: {}]
  %s3 = inlined_call_operand.vmem [shape: f32[1,1,4], index: 3, kind: input, shape index: {}]
  %s4 = inlined_call_operand.hbm [shape: f32[1,1,128], index: 4, kind: output, shape index: {}]
  %s5 = sld [smem:[#allocation0]]
  $region26: #{tpu_custom_call.1} parent=0
    _
  %s7 = ssub.s32 1, %s5
  %s8 = scalar_select 0, %s7, %s5
  $region1: #{tpu_custom_call.1} parent=0
    #allocation2 [shape = 'u8[512]{0}', space=vmem, size = 0x400, scoped, tag = 'output window, operand 0, single buffered']
    #allocation3 [shape = 's32[1]{0}', space=sflag, size = 0x4, scoped, tag = 'scoped memory for tpu_custom_call.1']
    %9 = vsyncpa [#allocation3], 0
    // Predicated region
    $region2: #{tpu_custom_call.1} parent=1 // pred_check
      _
    $region3: #{tpu_custom_call.1} parent=1 // pred_check_branch
      %11 = sbr.rel (0) target = $region5
    $region4: #{tpu_custom_call.1} parent=1 // pred_region
      _
    $region5: #{tpu_custom_call.1} parent=1 // pred_fallthru
      _
    // Predicated region
    $region6: #{tpu_custom_call.1} parent=1 // pred_check
      _
    $region7: #{tpu_custom_call.1} parent=1 // pred_check_branch
      %13 = sbr.rel (0) target = $region9
    $region8: #{tpu_custom_call.1} parent=1 // pred_region
      _
    $region9: #{tpu_custom_call.1} parent=1 // pred_fallthru
      _
    // Predicated region
    $region10: #{tpu_custom_call.1} parent=1 // pred_check
      _
    $region11: #{tpu_custom_call.1} parent=1 // pred_check_branch
      %15 = sbr.rel (0) target = $region13
    $region12: #{tpu_custom_call.1} parent=1 // pred_region
      _
    $region13: #{tpu_custom_call.1} parent=1 // pred_fallthru
      _
    // Predicated region
    $region14: #{tpu_custom_call.1} parent=1 // pred_check
      _
    $region15: #{tpu_custom_call.1} parent=1 // pred_check_branch
      %17 = sbr.rel (0) target = $region17
    $region16: #{tpu_custom_call.1} parent=1 // pred_region
      _
    $region17: #{tpu_custom_call.1} parent=1 // pred_fallthru
      _
    %v18 = vld [vmem:[%s0] sm:$0xff]
    %v19 = vld [vmem:[%s1] sm:$0xff]
    %v20 = vld [vmem:[%s1 + $0x8] sm:$0xff]
    %v21 = vld [vmem:[%s1 + $0x10] sm:$0xff]
    %v22 = vld [vmem:[%s1 + $0x18] sm:$0xff]
    %v23 = vld [vmem:[%s2] sm:$0xff]
    %v24 = vld [vmem:[%s3] sm:$0x1]
    %v25 = vmul.f32 %v24, 0.03
    %v26 = vmul.f32 %v25, 1.442695
    %v27 = vpow.pop %v26
    %v28 = vmul.f32 %v24, -0.03
    %v29 = vmul.f32 %v28, 1.442695
    %v30 = vpow.pop %v29
    %v31 = vmul.f32 %v19, %v19
    %v32 = vmul.f32 %v20, %v20
    %v33 = vmul.f32 %v21, %v21
    %v34 = vmul.f32 %v22, %v22
    %vm35 = vcmask 261120
    %v37 = vsel %vm35, 1.0, 0
    %39 = vmatpush.msra.mxu0 0.0
    %40 = vmatpush.msra.mxu0 0.0
    %41 = vmatpush.msra.mxu0 0.0
    %42 = vmatpush.msra.mxu0 0.0
    %43 = vmatpush.msra.mxu0 0.0
    %44 = vmatpush.msra.mxu0 0.0
    %45 = vmatpush.msra.mxu0 0.0
    %46 = vmatpush.msra.mxu0 0.0
    %47 = vmatpush.msra.mxu0 0.0
    %48 = vmatpush.msra.mxu0 0.0
    %49 = vmatpush.msra.mxu0 0.0
    %50 = vmatpush.msra.mxu0 0.0
    %51 = vmatpush.msra.mxu0 %v34
    %52 = vmatpush.msra.mxu0 %v33
    %53 = vmatpush.msra.mxu0 %v32
    %54 = vmatpush.msra.mxu0 %v31
    %55 = vmatmul.f32.gmra.mxu0 %v37
    %v56 = vpop.f32.mrf.mxu0
    %v57 = vadd.f32 0.0, %v56
    %58 = vdwg.mxu0
    %v60 = vsel %vm35, %v18, 0
    %62 = vmatpush.msra.mxu0 0.0
    %63 = vmatpush.msra.mxu0 0.0
    %64 = vmatpush.msra.mxu0 0.0
    %65 = vmatpush.msra.mxu0 0.0
    %66 = vmatpush.msra.mxu0 0.0
    %67 = vmatpush.msra.mxu0 0.0
    %68 = vmatpush.msra.mxu0 0.0
    %69 = vmatpush.msra.mxu0 0.0
    %70 = vmatpush.msra.mxu0 0.0
    %71 = vmatpush.msra.mxu0 0.0
    %72 = vmatpush.msra.mxu0 0.0
    %73 = vmatpush.msra.mxu0 0.0
    %74 = vmatpush.msra.mxu0 %v22
    %75 = vmatpush.msra.mxu0 %v21
    %76 = vmatpush.msra.mxu0 %v20
    %77 = vmatpush.msra.mxu0 %v19
    %78 = vmatmul.f32.gmra.mxu0 %v60
    %v79 = vpop.f32.mrf.mxu0
    %v80 = vadd.f32 0.0, %v79
    %81 = vdwg.mxu0
    %v82 = vmul.f32 %v80, 2.0
    %v83 = vperm.slane %v57, 0
    %v84 = vsub.f32 %v82, %v83
    %vm85 = vcmask 31744
    %v86 = vsel %vm85, %v84, -inf
    %87 = vmax.xlane.f32.xlu0 %v86
    %v88 = vpop.xlane.xlu0 %87
    %v89 = vsub.f32 %v84, %v88
    %v90 = vmul.f32 %v89, 1.442695
    %v91 = vpow.pop %v90
    %v92 = vsel %vm85, %v91, 0.0
    %93 = vadd.xlane.f32.xlu0 %v92
    %v94 = vpop.xlane.xlu0 %93
    %v95 = vlog2.pop %v94
    %v96 = vmul.f32 %v95, 0.6931472
    %v97 = vsub.f32 %v89, %v96
    %v98 = vrcp.pop %v94
    %v99 = vmul.f32 %v94, %v98
    %v100 = vsub.f32 1.0, %v99
    %v101 = vmul.f32 %v98, %v100
    %v102 = vadd.f32 %v98, %v101
    %vm103 = vweird.f32 %v94
    %vm104 = vweird.f32 %v98
    %vm105 = vmor %vm103, %vm104
    %v106 = vsel %vm105, %v98, %v102
    %v107 = vand.u32 2147483647, %v94
    %vm108 = vcmp.eq.f32.partialorder %v107, 8.507059e+37
    %v109 = vand.u32 %v94, 2147483648
    %v110 = vor.u32 1.1754944e-38, %v109
    %v111 = vsel %vm108, %v110, %v106
    %v112 = vmul.f32 %v91, %v111
    %v113 = vsub.f32 0.0, %v23
    %v114 = vmul.f32 %v113, %v97
    %v115 = vsel %vm85, %v114, 0.0
    %116 = vadd.xlane.f32.xlu0 %v115
    %v117 = vpop.xlane.xlu0 %116
    %v118 = vrot.slane %v117, 4
    %v119 = vadd.f32 %v117, %v118
    %v120 = vrot.slane %v119, 2
    %v121 = vadd.f32 %v119, %v120
    %v122 = vrot.slane %v121, 1
    %v123 = vadd.f32 %v121, %v122
    %s124 = vtos %v123
    %v125 = vrcp.pop 32.0
    %v126 = vmul.f32 32.0, %v125
    %v127 = vsub.f32 1.0, %v126
    %v128 = vmul.f32 %v125, %v127
    %v129 = vadd.f32 %v125, %v128
    %vm130 = vweird.f32 %v125
    %v131 = vsel %vm130, %v125, %v129
    %s132 = vtos %v131
    %s133 = smul.f32 %s124, %s132
    %v134 = vmul.f32 %v23, %v112
    %v135 = vsub.f32 1.0, %v23
    %v136 = vmul.f32 %v135, %v112
    %v137 = vmul.f32 %v136, 0.03
    %v138 = vmul.f32 %v137, 1.442695
    %v139 = vpow.pop %v138
    %v140 = vsel %vm85, %v139, 0.0
    %v141 = vrot.slane %v140, 4
    %v142 = vadd.f32 %v140, %v141
    %v143 = vrot.slane %v142, 2
    %v144 = vadd.f32 %v142, %v143
    %v145 = vrot.slane %v144, 1
    %v146 = vadd.f32 %v144, %v145
    %v147 = vmul.f32 %v134, -0.03
    %v148 = vmul.f32 %v147, 1.442695
    %v149 = vpow.pop %v148
    %v150 = vsel %vm85, %v149, 0.0
    %v151 = vrot.slane %v150, 4
    %v152 = vadd.f32 %v150, %v151
    %v153 = vrot.slane %v152, 2
    %v154 = vadd.f32 %v152, %v153
    %v155 = vrot.slane %v154, 1
    %v156 = vadd.f32 %v154, %v155
    %v157 = vadd.f32 %v27, %v146
    %v158 = vadd.f32 %v157, 1e-10
    %v159 = vlog2.pop %v158
    %v160 = vmul.f32 %v159, 0.6931472
    %v161 = vadd.f32 %v30, %v156
    %v162 = vadd.f32 %v161, 1e-10
    %v163 = vlog2.pop %v162
    %v164 = vmul.f32 %v163, 0.6931472
    %v165 = vadd.f32 %v160, %v164
    %vm166 = vcmask 24576
    %v167 = vsel %vm166, %v165, 0.0
    %168 = vadd.xlane.f32.xlu0 %v167
    %v169 = vpop.xlane.xlu0 %168
    %v170 = vrot.slane %v169, 4
    %v171 = vadd.f32 %v169, %v170
    %v172 = vrot.slane %v171, 2
    %v173 = vadd.f32 %v171, %v172
    %v174 = vrot.slane %v173, 1
    %v175 = vadd.f32 %v173, %v174
    %s176 = vtos %v175
    %v177 = vrcp.pop 4.0
    %v178 = vmul.f32 4.0, %v177
    %v179 = vsub.f32 1.0, %v178
    %v180 = vmul.f32 %v177, %v179
    %v181 = vadd.f32 %v177, %v180
    %vm182 = vweird.f32 %v177
    %v183 = vsel %vm182, %v177, %v181
    %s184 = vtos %v183
    %s185 = smul.f32 %s176, %s184
    %s186 = smul.f32 %s185, 0.5
    %s187 = sadd.f32 %s133, %s186
    %v189 = vperm.slane %v24, 0
    %v191 = vsub.f32 %v112, %v189
    %vm192 = vcmp.ge.f32.partialorder %v191, 0.0
    %v193 = vsel %vm192, 1, 0
    %v194 = vcvt.s32.f32 %v193
    %v195 = vsel %vm85, %v194, 0.0
    %196 = vadd.xlane.f32.xlu0 %v195
    %v197 = vpop.xlane.xlu0 %196
    %v198 = vsel %vm85, %v23, 0.0
    %199 = vadd.xlane.f32.xlu0 %v198
    %v200 = vpop.xlane.xlu0 %199
    %v201 = vmul.f32 %v194, %v23
    %v202 = vsel %vm85, %v201, 0.0
    %203 = vadd.xlane.f32.xlu0 %v202
    %v204 = vpop.xlane.xlu0 %203
    %v205 = vrot.slane %v204, 4
    %v206 = vadd.f32 %v204, %v205
    %v207 = vrot.slane %v206, 2
    %v208 = vadd.f32 %v206, %v207
    %v209 = vrot.slane %v208, 1
    %v210 = vadd.f32 %v208, %v209
    %s211 = vtos %v210
    %vm212 = vcmask 7168
    %v213 = vsel %vm212, %v197, 0.0
    %214 = vadd.xlane.f32.xlu0 %v213
    %v215 = vpop.xlane.xlu0 %214
    %v216 = vrot.slane %v215, 4
    %v217 = vadd.f32 %v215, %v216
    %v218 = vrot.slane %v217, 2
    %v219 = vadd.f32 %v217, %v218
    %v220 = vrot.slane %v219, 1
    %v221 = vadd.f32 %v219, %v220
    %s222 = vtos %v221
    %s223 = ssub.f32 %s222, %s211
    %v224 = vsel %vm212, %v200, 0.0
    %225 = vadd.xlane.f32.xlu0 %v224
    %v226 = vpop.xlane.xlu0 %225
    %v227 = vrot.slane %v226, 4
    %v228 = vadd.f32 %v226, %v227
    %v229 = vrot.slane %v228, 2
    %v230 = vadd.f32 %v228, %v229
    %v231 = vrot.slane %v230, 1
    %v232 = vadd.f32 %v230, %v231
    %s233 = vtos %v232
    %s234 = ssub.f32 %s233, %s211
    %s235 = sadd.f32 %s211, %s223
    %s236 = sadd.f32 %s211, %s234
    %p237 = scmp.gt.f32.partialorder %s235, 0.0
    %s238 = smax.f32 %s235, 1.0
    %v239 = vstv %s238
    %v240 = vrcp.pop %v239
    %v241 = vmul.f32 %v239, %v240
    %v242 = vsub.f32 1.0, %v241
    %v243 = vmul.f32 %v240, %v242
    %v244 = vadd.f32 %v240, %v243
    %vm245 = vweird.f32 %v239
    %vm246 = vweird.f32 %v240
    %vm247 = vmor %vm245, %vm246
    %v248 = vsel %vm247, %v240, %v244
    %v249 = vand.u32 2147483647, %v239
    %vm250 = vcmp.eq.f32.partialorder %v249, 8.507059e+37
    %v251 = vand.u32 %v239, 2147483648
    %v252 = vor.u32 1.1754944e-38, %v251
    %v253 = vsel %vm250, %v252, %v248
    %s254 = vtos %v253
    %s255 = smul.f32 %s211, %s254
    %s256 = scalar_select %p237, %s255, 0.0
    %p257 = scmp.gt.f32.partialorder %s236, 0.0
    %s258 = smax.f32 %s236, 1.0
    %v259 = vstv %s258
    %v260 = vrcp.pop %v259
    %v261 = vmul.f32 %v259, %v260
    %v262 = vsub.f32 1.0, %v261
    %v263 = vmul.f32 %v260, %v262
    %v264 = vadd.f32 %v260, %v263
    %vm265 = vweird.f32 %v259
    %vm266 = vweird.f32 %v260
    %vm267 = vmor %vm265, %vm266
    %v268 = vsel %vm267, %v260, %v264
    %v269 = vand.u32 2147483647, %v259
    %vm270 = vcmp.eq.f32.partialorder %v269, 8.507059e+37
    %v271 = vand.u32 %v259, 2147483648
    %v272 = vor.u32 1.1754944e-38, %v271
    %v273 = vsel %vm270, %v272, %v268
    %s274 = vtos %v273
    %s275 = smul.f32 %s211, %s274
    %s276 = scalar_select %p257, %s275, 0.0
    %s277 = sadd.f32 %s256, %s276
    %p278 = scmp.gt.f32.partialorder %s277, 0.0
    %s279 = smul.f32 %s256, 2.0
    %s280 = smul.f32 %s279, %s276
    %s281 = smax.f32 %s277, 1e-30
    %v282 = vstv %s281
    %v283 = vrcp.pop %v282
    %v284 = vmul.f32 %v282, %v283
    %v285 = vsub.f32 1.0, %v284
    %v286 = vmul.f32 %v283, %v285
    %v287 = vadd.f32 %v283, %v286
    %vm288 = vweird.f32 %v282
    %vm289 = vweird.f32 %v283
    %vm290 = vmor %vm288, %vm289
    %v291 = vsel %vm290, %v283, %v287
    %v292 = vand.u32 2147483647, %v282
    %vm293 = vcmp.eq.f32.partialorder %v292, 8.507059e+37
    %v294 = vand.u32 %v282, 2147483648
    %v295 = vor.u32 1.1754944e-38, %v294
    %v296 = vsel %vm293, %v295, %v291
    %s297 = vtos %v296
    %s298 = smul.f32 %s280, %s297
    %s299 = scalar_select %p278, %s298, 0.0
    %v300 = vsub.f32 %v194, %v23
    %v301 = vand.u32 2147483647, %v300
    %v302 = vsel %vm85, %v301, 0.0
    %303 = vadd.xlane.f32.xlu0 %v302
    %v304 = vpop.xlane.xlu0 %303
    %vm305 = vcmp.lt.f32.partialorder %v304, 0.5
    %v306 = vsel %vm305, 1, 0
    %v307 = vcvt.s32.f32 %v306
    %v308 = vsel %vm212, %v307, 0.0
    %309 = vadd.xlane.f32.xlu0 %v308
    %v310 = vpop.xlane.xlu0 %309
    %v311 = vrot.slane %v310, 4
    %v312 = vadd.f32 %v310, %v311
    %v313 = vrot.slane %v312, 2
    %v314 = vadd.f32 %v312, %v313
    %v315 = vrot.slane %v314, 1
    %v316 = vadd.f32 %v314, %v315
    %s317 = vtos %v316
    %v318 = vrcp.pop 8.0
    %v319 = vmul.f32 8.0, %v318
    %v320 = vsub.f32 1.0, %v319
    %v321 = vmul.f32 %v318, %v320
    %v322 = vadd.f32 %v318, %v321
    %vm323 = vweird.f32 %v318
    %v324 = vsel %vm323, %v318, %v322
    %s325 = vtos %v324
    %s326 = smul.f32 %s317, %s325
    %v327 = vsub.f32 %v197, %v200
    %v328 = vand.u32 2147483647, %v327
    %vm329 = vcmp.lt.f32.partialorder %v328, 0.5
    %v330 = vsel %vm329, 1, 0
    %v331 = vcvt.s32.f32 %v330
    %v332 = vsel %vm212, %v331, 0.0
    %333 = vadd.xlane.f32.xlu0 %v332
    %v334 = vpop.xlane.xlu0 %333
    %v335 = vrot.slane %v334, 4
    %v336 = vadd.f32 %v334, %v335
    %v337 = vrot.slane %v336, 2
    %v338 = vadd.f32 %v336, %v337
    %v339 = vrot.slane %v338, 1
    %v340 = vadd.f32 %v338, %v339
    %s341 = vtos %v340
    %v342 = vrcp.pop 8.0
    %v343 = vmul.f32 8.0, %v342
    %v344 = vsub.f32 1.0, %v343
    %v345 = vmul.f32 %v342, %v344
    %v346 = vadd.f32 %v342, %v345
    %vm347 = vweird.f32 %v342
    %v348 = vsel %vm347, %v342, %v346
    %s349 = vtos %v348
    %s350 = smul.f32 %s341, %s349
    %v351 = vlaneseq
    %v352 = vand.u32 %v351, 127
    %vm353 = vcmp.eq.s32.totalorder %v352, 0
    %v354 = vstv %s187
    %v355 = vsel %vm353, %v354, 0.0
    %vm356 = vcmp.eq.s32.totalorder %v352, 1
    %v357 = vstv %s256
    %v358 = vsel %vm356, %v357, %v355
    %vm359 = vcmp.eq.s32.totalorder %v352, 2
    %v360 = vstv %s276
    %v361 = vsel %vm359, %v360, %v358
    %vm362 = vcmp.eq.s32.totalorder %v352, 3
    %v363 = vstv %s299
    %v364 = vsel %vm362, %v363, %v361
    %vm365 = vcmp.eq.s32.totalorder %v352, 4
    %v366 = vstv %s326
    %v367 = vsel %vm365, %v366, %v364
    %vm368 = vcmp.eq.s32.totalorder %v352, 5
    %v369 = vstv %s350
    %v370 = vsel %vm368, %v369, %v367
    %371 = vst [vmem:[#allocation2] sm:$0x1] %v370
    // Predicated region
    $region18: #{tpu_custom_call.1} parent=1 // pred_check
      _
    $region19: #{tpu_custom_call.1} parent=1 // pred_check_branch
      %373 = sbr.rel (0) target = $region21
    $region20: #{tpu_custom_call.1} parent=1 // pred_region
      %375 = vsyncadd [#allocation3], 0
      %s377 = sshll.u32 [#allocation2], 4
      %s378 = int_to_ptr.vmem [resolvable:$true] %s377
      %s379 = sshll.u32 %s4, 4
      %s380 = int_to_ptr.hbm [resolvable:$true] %s379
      %382 = dma.vmem_to_hbm [thread:$0]  %s378, 16, %s380, [#allocation3]
    $region21: #{tpu_custom_call.1} parent=1 // pred_fallthru
      _
    // Predicated region
    $region22: #{tpu_custom_call.1} parent=1 // pred_check
      _
    $region23: #{tpu_custom_call.1} parent=1 // pred_check_branch
      %384 = sbr.rel (0) target = $region25
    $region24: #{tpu_custom_call.1} parent=1 // pred_region
      %386 = dma.done [#allocation3], 16
    $region25: #{tpu_custom_call.1} parent=1 // pred_fallthru
      _
    %387 = vsyncpa [#allocation3], 1

</llo_original>
